<compile_context>
chip_gen: v6e
topology: v6e:2x2x1
jax: 0.10.0
libtpu: 0.0.40
codegen_flags: <defaults>
</compile_context>

<pallas_src>
import jax
import jax.numpy as jnp
from jax.experimental import pallas as pl
from jax.experimental.pallas import tpu as pltpu


_IN, _H1, _H2, _OUT = 8, 32, 16, 1
_PACK = 16                      # samples packed per 128-lane row (128 // _IN)


def _mlp_kernel(x_ref, w1_ref, b1_ref, w2_ref, b2_ref, w3_ref, b3_ref, o_ref):
    # x_ref: (TBR, 128) -- 16 samples per row, lane-dense, unmasked loads.
    x = x_ref[...]

    h1 = jnp.dot(x, w1_ref[...], preferred_element_type=jnp.float32) + b1_ref[...]
    h1 = jnp.maximum(h1, 0.0)                                   # ReLU

    h2 = jnp.dot(h1, w2_ref[...], preferred_element_type=jnp.float32) + b2_ref[...]
    h2 = jnp.maximum(h2, 0.0)                                   # ReLU

    h3 = jnp.dot(h2, w3_ref[...], preferred_element_type=jnp.float32) + b3_ref[...]
    # Exact sigmoid: exp runs on the EUP, exact reciprocal on otherwise-idle
    # slots -- no approx error budget on the model's only output.
    o_ref[...] = pl.reciprocal(1.0 + jnp.exp(-h3), approx=False)


def _round_up(n, m):
    return ((n + m - 1) // m) * m


def _block_diag_params(params):
    """PyTorch-layout params -> block-diagonal weights / 16x-tiled biases.

    In a real deployment these tiny (<1 MiB) constants would be precomputed
    once, not per forward call.
    """
    w1, b1, w2, b2, w3, b3 = params
    eye = jnp.eye(_PACK, dtype=jnp.float32)
    bd1 = jnp.kron(eye, w1.T.astype(jnp.float32))            # (128, 512)
    bd2 = jnp.kron(eye, w2.T.astype(jnp.float32))            # (512, 256)
    bd3 = jnp.kron(eye, w3.T.astype(jnp.float32))            # (256, 16)
    tb1 = jnp.tile(b1.astype(jnp.float32), _PACK)[None, :]   # (1, 512)
    tb2 = jnp.tile(b2.astype(jnp.float32), _PACK)[None, :]   # (1, 256)
    tb3 = jnp.tile(b3.astype(jnp.float32), _PACK)[None, :]   # (1, 16)
    return bd1, tb1, bd2, tb2, bd3, tb3


def salary_predictor_forward(x, params, *, block_rows=2048):
    """x: (B, 8) float32.  Returns (B,) float32 (the .squeeze() of (B, 1)).

    block_rows = rows of 16 packed samples per grid tile (2048 rows = 32768
    samples ~= 1 MiB of streamed input per tile; tune 512..4096 per gen).
    """
    w_params = params
    B = x.shape[0]
    x = x.astype(jnp.float32)

    # Pack 16 samples per 128-lane row (free row-major reshape).  Only the
    # trailing <16 samples are ever padded; no transpose, no padding to the
    # tile size.
    B16 = _round_up(B, _PACK)
    if B16 != B:
        x = jnp.pad(x, ((0, B16 - B), (0, 0)))
    rows = B16 // _PACK
    x_packed = x.reshape(rows, _PACK * _IN)                   # (rows, 128)

    # Row-tile selection: one big tile when it fits, otherwise ~block_rows
    # rows per tile with an even tile count (v7x: keep both TCs busy).
    if rows <= block_rows:
        tbr, num_tiles = rows, 1
    else:
        num_tiles = pl.cdiv(rows, block_rows)
        if num_tiles % 2:
            num_tiles += 1                                    # balanced v7x cores
        tbr = _round_up(pl.cdiv(rows, num_tiles), 8)
        num_tiles = pl.cdiv(rows, tbr)

    bd1, tb1, bd2, tb2, bd3, tb3 = _block_diag_params(w_params)

    weight_bytes = 4 * sum(int(a.size) for a in (bd1, tb1, bd2, tb2, bd3, tb3))
    cost = pl.CostEstimate(
        flops=2 * rows * (128 * 512 + 512 * 256 + 256 * 16),
        transcendentals=B16,
        bytes_accessed=rows * (128 + _PACK) * 4 + weight_bytes,
    )

    const_spec = lambda a: pl.BlockSpec(a.shape, lambda i: (0, 0))

    out = pl.pallas_call(
        _mlp_kernel,
        out_shape=jax.ShapeDtypeStruct((rows, _PACK * _OUT), jnp.float32),
        grid=(num_tiles,),
        in_specs=[
            pl.BlockSpec((tbr, _PACK * _IN), lambda i: (i, 0)),   # streamed x
            const_spec(bd1), const_spec(tb1),                     # constant blocks
            const_spec(bd2), const_spec(tb2),
            const_spec(bd3), const_spec(tb3),
        ],
        out_specs=pl.BlockSpec((tbr, _PACK * _OUT), lambda i: (i, 0)),
        compiler_params=pltpu.CompilerParams(
            dimension_semantics=("parallel",),       # shard batch tiles over TCs
            vmem_limit_bytes=32 * 1024 * 1024,       # lift v5e's 16 MiB default
        ),
        cost_estimate=cost,
    )(x_packed, bd1, tb1, bd2, tb2, bd3, tb3)

    # (rows, 16) -> (B16,) is a free row-major reshape; drop padded samples.
    # (PyTorch: predicted_output = x.squeeze())
    return out.reshape(B16)[:B]


def init_params(key):
    """Deterministic init matching nn.Linear: W is (out, in), b is (out,)."""
    ks = jax.random.split(key, 6)

    def linear(kw, kb, fan_in, fan_out):
        # PyTorch default-ish: U(-1/sqrt(fan_in), 1/sqrt(fan_in))
        bound = 1.0 / jnp.sqrt(float(fan_in))
        w = jax.random.uniform(kw, (fan_out, fan_in), jnp.float32, -bound, bound)
        b = jax.random.uniform(kb, (fan_out,), jnp.float32, -bound, bound)
        return w, b

    w1, b1 = linear(ks[0], ks[1], _IN, _H1)
    w2, b2 = linear(ks[2], ks[3], _H1, _H2)
    w3, b3 = linear(ks[4], ks[5], _H2, _OUT)
    return (w1, b1, w2, b2, w3, b3)


if __name__ == "__main__":
    key = jax.random.PRNGKey(0)
    k_x, k_p = jax.random.split(key)

    B = 8  # small batch for the demo
    x = jax.random.normal(k_x, (B, _IN), dtype=jnp.float32)
    params = init_params(k_p)

    y = salary_predictor_forward(x, params)
    y = jax.block_until_ready(y)

    # Sanity check against plain-JAX reference (standard (B, F) layout).
    w1, b1, w2, b2, w3, b3 = params
    h = jnp.maximum(x @ w1.T + b1, 0.0)
    h = jnp.maximum(h @ w2.T + b2, 0.0)
    ref = (1.0 / (1.0 + jnp.exp(-(h @ w3.T + b3))))[:, 0]

    assert y.shape == (B,), y.shape
    assert jnp.allclose(y, ref, atol=1e-3, rtol=1e-3), (y, ref)

    print("KERNEL_OK")
</pallas_src>

<mosaic_0001>
module attributes {stable_mosaic.version = 11 : i64} {
  func.func @_mlp_kernel(%arg0: i32, %arg1: memref<1x128xf32, #tpu.memory_space<vmem>>, %arg2: memref<128x512xf32, #tpu.memory_space<vmem>>, %arg3: memref<1x512xf32, #tpu.memory_space<vmem>>, %arg4: memref<512x256xf32, #tpu.memory_space<vmem>>, %arg5: memref<1x256xf32, #tpu.memory_space<vmem>>, %arg6: memref<256x16xf32, #tpu.memory_space<vmem>>, %arg7: memref<1x16xf32, #tpu.memory_space<vmem>>, %arg8: memref<1x16xf32, #tpu.memory_space<vmem>>) attributes {dimension_semantics = [#tpu.dimension_semantics<parallel>], iteration_bounds = array<i64: 1>, scalar_prefetch = 0 : i64, scratch_operands = 0 : i64, tpu.core_type = #tpu.core_type<tc>, window_params = [{transform_indices = @transform_0, window_bounds = array<i64: 1, 128>}, {pipeline_mode = #tpu.pipeline_mode<synchronous>, transform_indices = @transform_1, window_bounds = array<i64: 128, 512>}, {pipeline_mode = #tpu.pipeline_mode<synchronous>, transform_indices = @transform_2, window_bounds = array<i64: 1, 512>}, {pipeline_mode = #tpu.pipeline_mode<synchronous>, transform_indices = @transform_3, window_bounds = array<i64: 512, 256>}, {pipeline_mode = #tpu.pipeline_mode<synchronous>, transform_indices = @transform_4, window_bounds = array<i64: 1, 256>}, {pipeline_mode = #tpu.pipeline_mode<synchronous>, transform_indices = @transform_5, window_bounds = array<i64: 256, 16>}, {pipeline_mode = #tpu.pipeline_mode<synchronous>, transform_indices = @transform_6, window_bounds = array<i64: 1, 16>}, {transform_indices = @transform_7, window_bounds = array<i64: 1, 16>}]} {
    %c0 = arith.constant 0 : index
    %c0_0 = arith.constant 0 : index
    %0 = vector.load %arg1[%c0, %c0_0] : memref<1x128xf32, #tpu.memory_space<vmem>>, vector<1x128xf32>
    %c0_1 = arith.constant 0 : index
    %c0_2 = arith.constant 0 : index
    %1 = vector.load %arg2[%c0_1, %c0_2] : memref<128x512xf32, #tpu.memory_space<vmem>>, vector<128x512xf32>
    %cst = arith.constant dense<0.000000e+00> : vector<1x512xf32>
    %2 = tpu.matmul %0, %1, %cst {dimension_numbers = #tpu.dot_dimension_numbers<[1], [0], [0], [1], [0, 0, 1, 1], [], []>} : vector<1x128xf32>, vector<128x512xf32>, vector<1x512xf32> -> vector<1x512xf32>
    %c0_3 = arith.constant 0 : index
    %c0_4 = arith.constant 0 : index
    %3 = vector.load %arg3[%c0_3, %c0_4] : memref<1x512xf32, #tpu.memory_space<vmem>>, vector<1x512xf32>
    %4 = arith.addf %2, %3 : vector<1x512xf32>
    %cst_5 = arith.constant 0.000000e+00 : f32
    %5 = vector.broadcast %cst_5 : f32 to vector<1x512xf32>
    %6 = arith.maximumf %4, %5 : vector<1x512xf32>
    %c0_6 = arith.constant 0 : index
    %c0_7 = arith.constant 0 : index
    %7 = vector.load %arg4[%c0_6, %c0_7] : memref<512x256xf32, #tpu.memory_space<vmem>>, vector<512x256xf32>
    %cst_8 = arith.constant dense<0.000000e+00> : vector<1x256xf32>
    %8 = tpu.matmul %6, %7, %cst_8 {dimension_numbers = #tpu.dot_dimension_numbers<[1], [0], [0], [1], [0, 0, 1, 1], [], []>} : vector<1x512xf32>, vector<512x256xf32>, vector<1x256xf32> -> vector<1x256xf32>
    %c0_9 = arith.constant 0 : index
    %c0_10 = arith.constant 0 : index
    %9 = vector.load %arg5[%c0_9, %c0_10] : memref<1x256xf32, #tpu.memory_space<vmem>>, vector<1x256xf32>
    %10 = arith.addf %8, %9 : vector<1x256xf32>
    %cst_11 = arith.constant 0.000000e+00 : f32
    %11 = vector.broadcast %cst_11 : f32 to vector<1x256xf32>
    %12 = arith.maximumf %10, %11 : vector<1x256xf32>
    %c0_12 = arith.constant 0 : index
    %c0_13 = arith.constant 0 : index
    %13 = vector.load %arg6[%c0_12, %c0_13] : memref<256x16xf32, #tpu.memory_space<vmem>>, vector<256x16xf32>
    %cst_14 = arith.constant dense<0.000000e+00> : vector<1x16xf32>
    %14 = tpu.matmul %12, %13, %cst_14 {dimension_numbers = #tpu.dot_dimension_numbers<[1], [0], [0], [1], [0, 0, 1, 1], [], []>} : vector<1x256xf32>, vector<256x16xf32>, vector<1x16xf32> -> vector<1x16xf32>
    %c0_15 = arith.constant 0 : index
    %c0_16 = arith.constant 0 : index
    %15 = vector.load %arg7[%c0_15, %c0_16] : memref<1x16xf32, #tpu.memory_space<vmem>>, vector<1x16xf32>
    %16 = arith.addf %14, %15 : vector<1x16xf32>
    %cst_17 = arith.constant 0.000000e+00 : f32
    %17 = vector.broadcast %cst_17 : f32 to vector<1x16xf32>
    %18 = arith.subf %17, %16 : vector<1x16xf32>
    %19 = math.exp %18 : vector<1x16xf32>
    %cst_18 = arith.constant 1.000000e+00 : f32
    %20 = vector.broadcast %cst_18 : f32 to vector<1x16xf32>
    %21 = arith.addf %20, %19 : vector<1x16xf32>
    %22 = tpu.reciprocal %21 : vector<1x16xf32> -> vector<1x16xf32>
    %c0_19 = arith.constant 0 : index
    %c0_20 = arith.constant 0 : index
    %23 = vector.load %arg8[%c0_19, %c0_20] : memref<1x16xf32, #tpu.memory_space<vmem>>, vector<1x16xf32>
    tpu.vector_store %arg8[%c0_19, %c0_20], %22 {strides = array<i32>} : memref<1x16xf32, #tpu.memory_space<vmem>>, vector<1x16xf32>,
    return
  }
  func.func @transform_0(%arg0: i32) -> (i32, i32) {
    %c0_i32 = arith.constant 0 : i32
    %c0_i32_0 = arith.constant 0 : i32
    return %arg0, %c0_i32 : i32, i32
  }
  func.func @transform_1(%arg0: i32) -> (i32, i32) {
    %c0_i32 = arith.constant 0 : i32
    %c0_i32_0 = arith.constant 0 : i32
    %c0_i32_1 = arith.constant 0 : i32
    return %c0_i32, %c0_i32_0 : i32, i32
  }
  func.func @transform_2(%arg0: i32) -> (i32, i32) {
    %c0_i32 = arith.constant 0 : i32
    %c0_i32_0 = arith.constant 0 : i32
    %c0_i32_1 = arith.constant 0 : i32
    return %c0_i32, %c0_i32_0 : i32, i32
  }
  func.func @transform_3(%arg0: i32) -> (i32, i32) {
    %c0_i32 = arith.constant 0 : i32
    %c0_i32_0 = arith.constant 0 : i32
    %c0_i32_1 = arith.constant 0 : i32
    return %c0_i32, %c0_i32_0 : i32, i32
  }
  func.func @transform_4(%arg0: i32) -> (i32, i32) {
    %c0_i32 = arith.constant 0 : i32
    %c0_i32_0 = arith.constant 0 : i32
    %c0_i32_1 = arith.constant 0 : i32
    return %c0_i32, %c0_i32_0 : i32, i32
  }
  func.func @transform_5(%arg0: i32) -> (i32, i32) {
    %c0_i32 = arith.constant 0 : i32
    %c0_i32_0 = arith.constant 0 : i32
    %c0_i32_1 = arith.constant 0 : i32
    return %c0_i32, %c0_i32_0 : i32, i32
  }
  func.func @transform_6(%arg0: i32) -> (i32, i32) {
    %c0_i32 = arith.constant 0 : i32
    %c0_i32_0 = arith.constant 0 : i32
    %c0_i32_1 = arith.constant 0 : i32
    return %c0_i32, %c0_i32_0 : i32, i32
  }
  func.func @transform_7(%arg0: i32) -> (i32, i32) {
    %c0_i32 = arith.constant 0 : i32
    %c0_i32_0 = arith.constant 0 : i32
    return %arg0, %c0_i32 : i32, i32
  }
}

</mosaic_0001>

<llo_original>
// kernel: tpu_custom_call.1
$region0: #{tpu_custom_call.1}
  #allocation0 [shape = 'u32[]', space=smem, size = 0x4, offset = 0x4, fixed_abs, tag = 'smem constant byte address 0x4 - core index']
  #allocation1 [shape = 'u32[144,128]{1,0:T(1,128)}', space=vmem, size = 0x12000, scoped, tag = 'internal scratch']
  %s0 = inlined_call_operand.vmem [shape: f32[1,128], index: 0, kind: input, shape index: {}]
  %s1 = inlined_call_operand.hbm [shape: f32[128,512], index: 1, kind: input, shape index: {}]
  %s2 = inlined_call_operand.vmem [shape: f32[1,512], index: 2, kind: input, shape index: {}]
  %s3 = inlined_call_operand.hbm [shape: f32[512,256], index: 3, kind: input, shape index: {}]
  %s4 = inlined_call_operand.vmem [shape: f32[1,256], index: 4, kind: input, shape index: {}]
  %s5 = inlined_call_operand.vmem [shape: f32[256,16], index: 5, kind: input, shape index: {}]
  %s6 = inlined_call_operand.vmem [shape: f32[1,16], index: 6, kind: input, shape index: {}]
  %s7 = inlined_call_operand.hbm [shape: f32[1,16], index: 7, kind: output, shape index: {}]
  %s8 = sld [smem:[#allocation0]]
  $region46: #{tpu_custom_call.1} parent=0
    _
  %s10 = ssub.s32 1, %s8
  %s11 = scalar_select 0, %s10, %s8
  $region1: #{tpu_custom_call.1} parent=0
    #allocation2 [shape = 'u8[262144]{0}', space=vmem, size = 0x40000, scoped, tag = 'input window, operand 1, single buffered']
    #allocation3 [shape = 's32[1]{0}', space=sflag, size = 0x4, scoped, tag = 'scoped memory for tpu_custom_call.1']
    #allocation4 [shape = 's32[1]{0}', space=sflag, size = 0x4, scoped, tag = 'scoped memory for tpu_custom_call.1']
    #allocation5 [shape = 'u8[524288]{0}', space=vmem, size = 0x80000, scoped, tag = 'input window, operand 3, single buffered']
    #allocation6 [shape = 's32[1]{0}', space=sflag, size = 0x4, scoped, tag = 'scoped memory for tpu_custom_call.1']
    #allocation7 [shape = 'u8[512]{0}', space=vmem, size = 0x400, scoped, tag = 'output window, operand 0, single buffered']
    %12 = vsyncpa [#allocation3], 0
    %13 = vsyncpa [#allocation6], 0
    %14 = vsyncpa [#allocation4], 0
    // Predicated region
    $region2: #{tpu_custom_call.1} parent=1 // pred_check
      _
    $region3: #{tpu_custom_call.1} parent=1 // pred_check_branch
      %16 = sbr.rel (0) target = $region5
    $region4: #{tpu_custom_call.1} parent=1 // pred_region
      _
    $region5: #{tpu_custom_call.1} parent=1 // pred_fallthru
      _
    // Predicated region
    $region6: #{tpu_custom_call.1} parent=1 // pred_check
      _
    $region7: #{tpu_custom_call.1} parent=1 // pred_check_branch
      %18 = sbr.rel (0) target = $region9
    $region8: #{tpu_custom_call.1} parent=1 // pred_region
      %s20 = ssub.s32 8192, 8192
      %21 = vsyncadd [#allocation3], %s20
      %s22 = sshll.u32 [#allocation2], 4
      %s23 = int_to_ptr.vmem [resolvable:$true] %s22
      %28 = dma.hbm_to_vmem [thread:$0]  %s1, 8192, %s23, [#allocation3], 512, 512, 32
    $region9: #{tpu_custom_call.1} parent=1 // pred_fallthru
      _
    // Predicated region
    $region10: #{tpu_custom_call.1} parent=1 // pred_check
      _
    $region11: #{tpu_custom_call.1} parent=1 // pred_check_branch
      %30 = sbr.rel (0) target = $region13
    $region12: #{tpu_custom_call.1} parent=1 // pred_region
      _
    $region13: #{tpu_custom_call.1} parent=1 // pred_fallthru
      _
    // Predicated region
    $region14: #{tpu_custom_call.1} parent=1 // pred_check
      _
    $region15: #{tpu_custom_call.1} parent=1 // pred_check_branch
      %32 = sbr.rel (0) target = $region17
    $region16: #{tpu_custom_call.1} parent=1 // pred_region
      %s34 = ssub.s32 16384, 16384
      %35 = vsyncadd [#allocation6], %s34
      %s36 = sshll.u32 [#allocation5], 4
      %s37 = int_to_ptr.vmem [resolvable:$true] %s36
      %42 = dma.hbm_to_vmem [thread:$0]  %s3, 16384, %s37, [#allocation6], 256, 256, 16
    $region17: #{tpu_custom_call.1} parent=1 // pred_fallthru
      _
    // Predicated region
    $region18: #{tpu_custom_call.1} parent=1 // pred_check
      _
    $region19: #{tpu_custom_call.1} parent=1 // pred_check_branch
      %44 = sbr.rel (0) target = $region21
    $region20: #{tpu_custom_call.1} parent=1 // pred_region
      _
    $region21: #{tpu_custom_call.1} parent=1 // pred_fallthru
      _
    // Predicated region
    $region22: #{tpu_custom_call.1} parent=1 // pred_check
      _
    $region23: #{tpu_custom_call.1} parent=1 // pred_check_branch
      %46 = sbr.rel (0) target = $region25
    $region24: #{tpu_custom_call.1} parent=1 // pred_region
      _
    $region25: #{tpu_custom_call.1} parent=1 // pred_fallthru
      _
    // Predicated region
    $region26: #{tpu_custom_call.1} parent=1 // pred_check
      _
    $region27: #{tpu_custom_call.1} parent=1 // pred_check_branch
      %48 = sbr.rel (0) target = $region29
    $region28: #{tpu_custom_call.1} parent=1 // pred_region
      _
    $region29: #{tpu_custom_call.1} parent=1 // pred_fallthru
      _
    // Predicated region
    $region30: #{tpu_custom_call.1} parent=1 // pred_check
      _
    $region31: #{tpu_custom_call.1} parent=1 // pred_check_branch
      %50 = sbr.rel (0) target = $region33
    $region32: #{tpu_custom_call.1} parent=1 // pred_region
      %51 = dma.done [#allocation3], 8192
    $region33: #{tpu_custom_call.1} parent=1 // pred_fallthru
      _
    // Predicated region
    $region34: #{tpu_custom_call.1} parent=1 // pred_check
      _
    $region35: #{tpu_custom_call.1} parent=1 // pred_check_branch
      %53 = sbr.rel (0) target = $region37
    $region36: #{tpu_custom_call.1} parent=1 // pred_region
      %54 = dma.done [#allocation6], 16384
    $region37: #{tpu_custom_call.1} parent=1 // pred_fallthru
      _
    %v55 = vld [vmem:[%s0] sm:$0x1]
    %v56 = vld [vmem:[#allocation2] sm:$0xff]
    %v57 = vld [vmem:[#allocation2 + $0x8] sm:$0xff]
    %v58 = vld [vmem:[#allocation2 + $0x10] sm:$0xff]
    %v59 = vld [vmem:[#allocation2 + $0x18] sm:$0xff]
    %v60 = vld [vmem:[#allocation2 + $0x20] sm:$0xff]
    %v61 = vld [vmem:[#allocation2 + $0x28] sm:$0xff]
    %v62 = vld [vmem:[#allocation2 + $0x30] sm:$0xff]
    %v63 = vld [vmem:[#allocation2 + $0x38] sm:$0xff]
    %v64 = vld [vmem:[#allocation2 + $0x40] sm:$0xff]
    %v65 = vld [vmem:[#allocation2 + $0x48] sm:$0xff]
    %v66 = vld [vmem:[#allocation2 + $0x50] sm:$0xff]
    %v67 = vld [vmem:[#allocation2 + $0x58] sm:$0xff]
    %v68 = vld [vmem:[#allocation2 + $0x60] sm:$0xff]
    %v69 = vld [vmem:[#allocation2 + $0x68] sm:$0xff]
    %v70 = vld [vmem:[#allocation2 + $0x70] sm:$0xff]
    %v71 = vld [vmem:[#allocation2 + $0x78] sm:$0xff]
    %v72 = vld [vmem:[#allocation2 + $0x80] sm:$0xff]
    %v73 = vld [vmem:[#allocation2 + $0x88] sm:$0xff]
    %v74 = vld [vmem:[#allocation2 + $0x90] sm:$0xff]
    %v75 = vld [vmem:[#allocation2 + $0x98] sm:$0xff]
    %v76 = vld [vmem:[#allocation2 + $0xa0] sm:$0xff]
    %v77 = vld [vmem:[#allocation2 + $0xa8] sm:$0xff]
    %v78 = vld [vmem:[#allocation2 + $0xb0] sm:$0xff]
    %v79 = vld [vmem:[#allocation2 + $0xb8] sm:$0xff]
    %v80 = vld [vmem:[#allocation2 + $0xc0] sm:$0xff]
    %v81 = vld [vmem:[#allocation2 + $0xc8] sm:$0xff]
    %v82 = vld [vmem:[#allocation2 + $0xd0] sm:$0xff]
    %v83 = vld [vmem:[#allocation2 + $0xd8] sm:$0xff]
    %v84 = vld [vmem:[#allocation2 + $0xe0] sm:$0xff]
    %v85 = vld [vmem:[#allocation2 + $0xe8] sm:$0xff]
    %v86 = vld [vmem:[#allocation2 + $0xf0] sm:$0xff]
    %v87 = vld [vmem:[#allocation2 + $0xf8] sm:$0xff]
    %v88 = vld [vmem:[#allocation2 + $0x100] sm:$0xff]
    %v89 = vld [vmem:[#allocation2 + $0x108] sm:$0xff]
    %v90 = vld [vmem:[#allocation2 + $0x110] sm:$0xff]
    %v91 = vld [vmem:[#allocation2 + $0x118] sm:$0xff]
    %v92 = vld [vmem:[#allocation2 + $0x120] sm:$0xff]
    %v93 = vld [vmem:[#allocation2 + $0x128] sm:$0xff]
    %v94 = vld [vmem:[#allocation2 + $0x130] sm:$0xff]
    %v95 = vld [vmem:[#allocation2 + $0x138] sm:$0xff]
    %v96 = vld [vmem:[#allocation2 + $0x140] sm:$0xff]
    %v97 = vld [vmem:[#allocation2 + $0x148] sm:$0xff]
    %v98 = vld [vmem:[#allocation2 + $0x150] sm:$0xff]
    %v99 = vld [vmem:[#allocation2 + $0x158] sm:$0xff]
    %v100 = vld [vmem:[#allocation2 + $0x160] sm:$0xff]
    %v101 = vld [vmem:[#allocation2 + $0x168] sm:$0xff]
    %v102 = vld [vmem:[#allocation2 + $0x170] sm:$0xff]
    %v103 = vld [vmem:[#allocation2 + $0x178] sm:$0xff]
    %v104 = vld [vmem:[#allocation2 + $0x180] sm:$0xff]
    %v105 = vld [vmem:[#allocation2 + $0x188] sm:$0xff]
    %v106 = vld [vmem:[#allocation2 + $0x190] sm:$0xff]
    %v107 = vld [vmem:[#allocation2 + $0x198] sm:$0xff]
    %v108 = vld [vmem:[#allocation2 + $0x1a0] sm:$0xff]
    %v109 = vld [vmem:[#allocation2 + $0x1a8] sm:$0xff]
    %v110 = vld [vmem:[#allocation2 + $0x1b0] sm:$0xff]
    %v111 = vld [vmem:[#allocation2 + $0x1b8] sm:$0xff]
    %v112 = vld [vmem:[#allocation2 + $0x1c0] sm:$0xff]
    %v113 = vld [vmem:[#allocation2 + $0x1c8] sm:$0xff]
    %v114 = vld [vmem:[#allocation2 + $0x1d0] sm:$0xff]
    %v115 = vld [vmem:[#allocation2 + $0x1d8] sm:$0xff]
    %v116 = vld [vmem:[#allocation2 + $0x1e0] sm:$0xff]
    %v117 = vld [vmem:[#allocation2 + $0x1e8] sm:$0xff]
    %v118 = vld [vmem:[#allocation2 + $0x1f0] sm:$0xff]
    %v119 = vld [vmem:[#allocation2 + $0x1f8] sm:$0xff]
    %v120 = vld [vmem:[%s2] sm:$0xf]
    %v122 = vlaneseq
    %v123 = vshrl.u32 %v122, 7
    %v124 = vsub.s32 0, %v123
    %v125 = vrot.slane %v120, %v124
    %v126 = vlaneseq
    %v127 = vshrl.u32 %v126, 7
    %v128 = vsub.s32 1, %v127
    %v129 = vrot.slane %v120, %v128
    %v130 = vlaneseq
    %v131 = vshrl.u32 %v130, 7
    %v132 = vsub.s32 2, %v131
    %v133 = vrot.slane %v120, %v132
    %v134 = vlaneseq
    %v135 = vshrl.u32 %v134, 7
    %v136 = vsub.s32 3, %v135
    %v137 = vrot.slane %v120, %v136
    %142 = vmatprep.subr.mxu0 %v117
    %143 = vmatpush1.msra.mxu0 %v116
    %144 = vmatprep.subr.mxu0 %v113
    %145 = vmatpush1.msra.mxu0 %v112
    %146 = vmatprep.subr.mxu0 %v109
    %147 = vmatpush1.msra.mxu0 %v108
    %148 = vmatprep.subr.mxu0 %v105
    %149 = vmatpush1.msra.mxu0 %v104
    %150 = vmatprep.subr.mxu0 %v101
    %151 = vmatpush1.msra.mxu0 %v100
    %152 = vmatprep.subr.mxu0 %v97
    %153 = vmatpush1.msra.mxu0 %v96
    %154 = vmatprep.subr.mxu0 %v93
    %155 = vmatpush1.msra.mxu0 %v92
    %156 = vmatprep.subr.mxu0 %v89
    %157 = vmatpush1.msra.mxu0 %v88
    %158 = vmatprep.subr.mxu0 %v85
    %159 = vmatpush1.msra.mxu0 %v84
    %160 = vmatprep.subr.mxu0 %v81
    %161 = vmatpush1.msra.mxu0 %v80
    %162 = vmatprep.subr.mxu0 %v77
    %163 = vmatpush1.msra.mxu0 %v76
    %164 = vmatprep.subr.mxu0 %v73
    %165 = vmatpush1.msra.mxu0 %v72
    %166 = vmatprep.subr.mxu0 %v69
    %167 = vmatpush1.msra.mxu0 %v68
    %168 = vmatprep.subr.mxu0 %v65
    %169 = vmatpush1.msra.mxu0 %v64
    %170 = vmatprep.subr.mxu0 %v61
    %171 = vmatpush1.msra.mxu0 %v60
    %172 = vmatprep.subr.mxu0 %v57
    %173 = vmatpush1.msra.mxu0 %v56
    %174 = vmatprep.subr.mxu0 0.0
    %175 = vmatpush2.msra.mxu0 0.0
    %176 = vmatprep.subr.mxu0 0.0
    %177 = vmatpush2.msra.mxu0 0.0
    %178 = vmatprep.subr.mxu0 0.0
    %179 = vmatpush2.msra.mxu0 0.0
    %180 = vmatprep.subr.mxu0 0.0
    %181 = vmatpush2.msra.mxu0 0.0
    %182 = vmatprep.subr.mxu0 0.0
    %183 = vmatpush2.msra.mxu0 0.0
    %184 = vmatprep.subr.mxu0 0.0
    %185 = vmatpush2.msra.mxu0 0.0
    %186 = vmatprep.subr.mxu0 0.0
    %187 = vmatpush2.msra.mxu0 0.0
    %188 = vmatprep.subr.mxu0 0.0
    %189 = vmatpush2.msra.mxu0 0.0
    %190 = vmatprep.subr.mxu0 0.0
    %191 = vmatpush2.msra.mxu0 0.0
    %192 = vmatprep.subr.mxu0 0.0
    %193 = vmatpush2.msra.mxu0 0.0
    %194 = vmatprep.subr.mxu0 0.0
    %195 = vmatpush2.msra.mxu0 0.0
    %196 = vmatprep.subr.mxu0 0.0
    %197 = vmatpush2.msra.mxu0 0.0
    %198 = vmatprep.subr.mxu0 0.0
    %199 = vmatpush2.msra.mxu0 0.0
    %200 = vmatprep.subr.mxu0 0.0
    %201 = vmatpush2.msra.mxu0 0.0
    %202 = vmatprep.subr.mxu0 0.0
    %203 = vmatpush2.msra.mxu0 0.0
    %204 = vmatprep.subr.mxu0 0.0
    %205 = vmatpush2.msra.mxu0 0.0
    %206 = vmatprep.mubr.f32.mxu0 0.0
    %207 = vmatmul.mubr.f32.gmra.mxu0 %v55
    %v208 = vpop.f32.mrf.mxu0
    %v209 = vadd.f32 %v125, %v208
    %v210 = vpop.f32.mrf.mxu0
    %v211 = vadd.f32 %v129, %v210
    %212 = vdwg.mxu0
    %213 = vmatprep.subr.mxu0 %v119
    %214 = vmatpush1.msra.mxu0 %v118
    %215 = vmatprep.subr.mxu0 %v115
    %216 = vmatpush1.msra.mxu0 %v114
    %217 = vmatprep.subr.mxu0 %v111
    %218 = vmatpush1.msra.mxu0 %v110
    %219 = vmatprep.subr.mxu0 %v107
    %220 = vmatpush1.msra.mxu0 %v106
    %221 = vmatprep.subr.mxu0 %v103
    %222 = vmatpush1.msra.mxu0 %v102
    %223 = vmatprep.subr.mxu0 %v99
    %224 = vmatpush1.msra.mxu0 %v98
    %225 = vmatprep.subr.mxu0 %v95
    %226 = vmatpush1.msra.mxu0 %v94
    %227 = vmatprep.subr.mxu0 %v91
    %228 = vmatpush1.msra.mxu0 %v90
    %229 = vmatprep.subr.mxu0 %v87
    %230 = vmatpush1.msra.mxu0 %v86
    %231 = vmatprep.subr.mxu0 %v83
    %232 = vmatpush1.msra.mxu0 %v82
    %233 = vmatprep.subr.mxu0 %v79
    %234 = vmatpush1.msra.mxu0 %v78
    %235 = vmatprep.subr.mxu0 %v75
    %236 = vmatpush1.msra.mxu0 %v74
    %237 = vmatprep.subr.mxu0 %v71
    %238 = vmatpush1.msra.mxu0 %v70
    %239 = vmatprep.subr.mxu0 %v67
    %240 = vmatpush1.msra.mxu0 %v66
    %241 = vmatprep.subr.mxu0 %v63
    %242 = vmatpush1.msra.mxu0 %v62
    %243 = vmatprep.subr.mxu0 %v59
    %244 = vmatpush1.msra.mxu0 %v58
    %245 = vmatprep.subr.mxu0 0.0
    %246 = vmatpush2.msra.mxu0 0.0
    %247 = vmatprep.subr.mxu0 0.0
    %248 = vmatpush2.msra.mxu0 0.0
    %249 = vmatprep.subr.mxu0 0.0
    %250 = vmatpush2.msra.mxu0 0.0
    %251 = vmatprep.subr.mxu0 0.0
    %252 = vmatpush2.msra.mxu0 0.0
    %253 = vmatprep.subr.mxu0 0.0
    %254 = vmatpush2.msra.mxu0 0.0
    %255 = vmatprep.subr.mxu0 0.0
    %256 = vmatpush2.msra.mxu0 0.0
    %257 = vmatprep.subr.mxu0 0.0
    %258 = vmatpush2.msra.mxu0 0.0
    %259 = vmatprep.subr.mxu0 0.0
    %260 = vmatpush2.msra.mxu0 0.0
    %261 = vmatprep.subr.mxu0 0.0
    %262 = vmatpush2.msra.mxu0 0.0
    %263 = vmatprep.subr.mxu0 0.0
    %264 = vmatpush2.msra.mxu0 0.0
    %265 = vmatprep.subr.mxu0 0.0
    %266 = vmatpush2.msra.mxu0 0.0
    %267 = vmatprep.subr.mxu0 0.0
    %268 = vmatpush2.msra.mxu0 0.0
    %269 = vmatprep.subr.mxu0 0.0
    %270 = vmatpush2.msra.mxu0 0.0
    %271 = vmatprep.subr.mxu0 0.0
    %272 = vmatpush2.msra.mxu0 0.0
    %273 = vmatprep.subr.mxu0 0.0
    %274 = vmatpush2.msra.mxu0 0.0
    %275 = vmatprep.subr.mxu0 0.0
    %276 = vmatpush2.msra.mxu0 0.0
    %277 = vmatprep.mubr.f32.mxu0 0.0
    %278 = vmatmul.mubr.f32.gmra.mxu0 %v55
    %v279 = vpop.f32.mrf.mxu0
    %v280 = vadd.f32 %v133, %v279
    %v281 = vpop.f32.mrf.mxu0
    %v282 = vadd.f32 %v137, %v281
    %283 = vdwg.mxu0
    %v284 = vmax.f32 %v209, 0.0
    %v285 = vmax.f32 %v211, 0.0
    %v286 = vmax.f32 %v280, 0.0
    %v287 = vmax.f32 %v282, 0.0
    %v288 = vld [vmem:[#allocation5] sm:$0xff]
    %v289 = vld [vmem:[#allocation5 + $0x8] sm:$0xff]
    %v290 = vld [vmem:[#allocation5 + $0x10] sm:$0xff]
    %v291 = vld [vmem:[#allocation5 + $0x18] sm:$0xff]
    %v292 = vld [vmem:[#allocation5 + $0x20] sm:$0xff]
    %v293 = vld [vmem:[#allocation5 + $0x28] sm:$0xff]
    %v294 = vld [vmem:[#allocation5 + $0x30] sm:$0xff]
    %v295 = vld [vmem:[#allocation5 + $0x38] sm:$0xff]
    %v296 = vld [vmem:[#allocation5 + $0x40] sm:$0xff]
    %v297 = vld [vmem:[#allocation5 + $0x48] sm:$0xff]
    %v298 = vld [vmem:[#allocation5 + $0x50] sm:$0xff]
    %v299 = vld [vmem:[#allocation5 + $0x58] sm:$0xff]
    %v300 = vld [vmem:[#allocation5 + $0x60] sm:$0xff]
    %v301 = vld [vmem:[#allocation5 + $0x68] sm:$0xff]
    %v302 = vld [vmem:[#allocation5 + $0x70] sm:$0xff]
    %v303 = vld [vmem:[#allocation5 + $0x78] sm:$0xff]
    %v304 = vld [vmem:[#allocation5 + $0x80] sm:$0xff]
    %v305 = vld [vmem:[#allocation5 + $0x88] sm:$0xff]
    %v306 = vld [vmem:[#allocation5 + $0x90] sm:$0xff]
    %v307 = vld [vmem:[#allocation5 + $0x98] sm:$0xff]
    %v308 = vld [vmem:[#allocation5 + $0xa0] sm:$0xff]
    %v309 = vld [vmem:[#allocation5 + $0xa8] sm:$0xff]
    %v310 = vld [vmem:[#allocation5 + $0xb0] sm:$0xff]
    %v311 = vld [vmem:[#allocation5 + $0xb8] sm:$0xff]
    %v312 = vld [vmem:[#allocation5 + $0xc0] sm:$0xff]
    %v313 = vld [vmem:[#allocation5 + $0xc8] sm:$0xff]
    %v314 = vld [vmem:[#allocation5 + $0xd0] sm:$0xff]
    %v315 = vld [vmem:[#allocation5 + $0xd8] sm:$0xff]
    %v316 = vld [vmem:[#allocation5 + $0xe0] sm:$0xff]
    %v317 = vld [vmem:[#allocation5 + $0xe8] sm:$0xff]
    %v318 = vld [vmem:[#allocation5 + $0xf0] sm:$0xff]
    %v319 = vld [vmem:[#allocation5 + $0xf8] sm:$0xff]
    %v320 = vld [vmem:[#allocation5 + $0x100] sm:$0xff]
    %v321 = vld [vmem:[#allocation5 + $0x108] sm:$0xff]
    %v322 = vld [vmem:[#allocation5 + $0x110] sm:$0xff]
    %v323 = vld [vmem:[#allocation5 + $0x118] sm:$0xff]
    %v324 = vld [vmem:[#allocation5 + $0x120] sm:$0xff]
    %v325 = vld [vmem:[#allocation5 + $0x128] sm:$0xff]
    %v326 = vld [vmem:[#allocation5 + $0x130] sm:$0xff]
    %v327 = vld [vmem:[#allocation5 + $0x138] sm:$0xff]
    %v328 = vld [vmem:[#allocation5 + $0x140] sm:$0xff]
    %v329 = vld [vmem:[#allocation5 + $0x148] sm:$0xff]
    %v330 = vld [vmem:[#allocation5 + $0x150] sm:$0xff]
    %v331 = vld [vmem:[#allocation5 + $0x158] sm:$0xff]
    %v332 = vld [vmem:[#allocation5 + $0x160] sm:$0xff]
    %v333 = vld [vmem:[#allocation5 + $0x168] sm:$0xff]
    %v334 = vld [vmem:[#allocation5 + $0x170] sm:$0xff]
    %v335 = vld [vmem:[#allocation5 + $0x178] sm:$0xff]
    %v336 = vld [vmem:[#allocation5 + $0x180] sm:$0xff]
    %v337 = vld [vmem:[#allocation5 + $0x188] sm:$0xff]
    %v338 = vld [vmem:[#allocation5 + $0x190] sm:$0xff]
    %v339 = vld [vmem:[#allocation5 + $0x198] sm:$0xff]
    %v340 = vld [vmem:[#allocation5 + $0x1a0] sm:$0xff]
    %v341 = vld [vmem:[#allocation5 + $0x1a8] sm:$0xff]
    %v342 = vld [vmem:[#allocation5 + $0x1b0] sm:$0xff]
    %v343 = vld [vmem:[#allocation5 + $0x1b8] sm:$0xff]
    %v344 = vld [vmem:[#allocation5 + $0x1c0] sm:$0xff]
    %v345 = vld [vmem:[#allocation5 + $0x1c8] sm:$0xff]
    %v346 = vld [vmem:[#allocation5 + $0x1d0] sm:$0xff]
    %v347 = vld [vmem:[#allocation5 + $0x1d8] sm:$0xff]
    %v348 = vld [vmem:[#allocation5 + $0x1e0] sm:$0xff]
    %v349 = vld [vmem:[#allocation5 + $0x1e8] sm:$0xff]
    %v350 = vld [vmem:[#allocation5 + $0x1f0] sm:$0xff]
    %v351 = vld [vmem:[#allocation5 + $0x1f8] sm:$0xff]
    %v352 = vld [vmem:[#allocation5 + $0x200] sm:$0xff]
    %v353 = vld [vmem:[#allocation5 + $0x208] sm:$0xff]
    %v354 = vld [vmem:[#allocation5 + $0x210] sm:$0xff]
    %v355 = vld [vmem:[#allocation5 + $0x218] sm:$0xff]
    %v356 = vld [vmem:[#allocation5 + $0x220] sm:$0xff]
    %v357 = vld [vmem:[#allocation5 + $0x228] sm:$0xff]
    %v358 = vld [vmem:[#allocation5 + $0x230] sm:$0xff]
    %v359 = vld [vmem:[#allocation5 + $0x238] sm:$0xff]
    %v360 = vld [vmem:[#allocation5 + $0x240] sm:$0xff]
    %v361 = vld [vmem:[#allocation5 + $0x248] sm:$0xff]
    %v362 = vld [vmem:[#allocation5 + $0x250] sm:$0xff]
    %v363 = vld [vmem:[#allocation5 + $0x258] sm:$0xff]
    %v364 = vld [vmem:[#allocation5 + $0x260] sm:$0xff]
    %v365 = vld [vmem:[#allocation5 + $0x268] sm:$0xff]
    %v366 = vld [vmem:[#allocation5 + $0x270] sm:$0xff]
    %v367 = vld [vmem:[#allocation5 + $0x278] sm:$0xff]
    %v368 = vld [vmem:[#allocation5 + $0x280] sm:$0xff]
    %v369 = vld [vmem:[#allocation5 + $0x288] sm:$0xff]
    %v370 = vld [vmem:[#allocation5 + $0x290] sm:$0xff]
    %v371 = vld [vmem:[#allocation5 + $0x298] sm:$0xff]
    %v372 = vld [vmem:[#allocation5 + $0x2a0] sm:$0xff]
    %v373 = vld [vmem:[#allocation5 + $0x2a8] sm:$0xff]
    %v374 = vld [vmem:[#allocation5 + $0x2b0] sm:$0xff]
    %v375 = vld [vmem:[#allocation5 + $0x2b8] sm:$0xff]
    %v376 = vld [vmem:[#allocation5 + $0x2c0] sm:$0xff]
    %v377 = vld [vmem:[#allocation5 + $0x2c8] sm:$0xff]
    %v378 = vld [vmem:[#allocation5 + $0x2d0] sm:$0xff]
    %v379 = vld [vmem:[#allocation5 + $0x2d8] sm:$0xff]
    %v380 = vld [vmem:[#allocation5 + $0x2e0] sm:$0xff]
    %v381 = vld [vmem:[#allocation5 + $0x2e8] sm:$0xff]
    %v382 = vld [vmem:[#allocation5 + $0x2f0] sm:$0xff]
    %v383 = vld [vmem:[#allocation5 + $0x2f8] sm:$0xff]
    %v384 = vld [vmem:[#allocation5 + $0x300] sm:$0xff]
    %v385 = vld [vmem:[#allocation5 + $0x308] sm:$0xff]
    %v386 = vld [vmem:[#allocation5 + $0x310] sm:$0xff]
    %v387 = vld [vmem:[#allocation5 + $0x318] sm:$0xff]
    %v388 = vld [vmem:[#allocation5 + $0x320] sm:$0xff]
    %v389 = vld [vmem:[#allocation5 + $0x328] sm:$0xff]
    %v390 = vld [vmem:[#allocation5 + $0x330] sm:$0xff]
    %v391 = vld [vmem:[#allocation5 + $0x338] sm:$0xff]
    %v392 = vld [vmem:[#allocation5 + $0x340] sm:$0xff]
    %v393 = vld [vmem:[#allocation5 + $0x348] sm:$0xff]
    %v394 = vld [vmem:[#allocation5 + $0x350] sm:$0xff]
    %v395 = vld [vmem:[#allocation5 + $0x358] sm:$0xff]
    %v396 = vld [vmem:[#allocation5 + $0x360] sm:$0xff]
    %v397 = vld [vmem:[#allocation5 + $0x368] sm:$0xff]
    %v398 = vld [vmem:[#allocation5 + $0x370] sm:$0xff]
    %v399 = vld [vmem:[#allocation5 + $0x378] sm:$0xff]
    %v400 = vld [vmem:[#allocation5 + $0x380] sm:$0xff]
    %v401 = vld [vmem:[#allocation5 + $0x388] sm:$0xff]
    %v402 = vld [vmem:[#allocation5 + $0x390] sm:$0xff]
    %v403 = vld [vmem:[#allocation5 + $0x398] sm:$0xff]
    %v404 = vld [vmem:[#allocation5 + $0x3a0] sm:$0xff]
    %v405 = vld [vmem:[#allocation5 + $0x3a8] sm:$0xff]
    %v406 = vld [vmem:[#allocation5 + $0x3b0] sm:$0xff]
    %v407 = vld [vmem:[#allocation5 + $0x3b8] sm:$0xff]
    %v408 = vld [vmem:[#allocation5 + $0x3c0] sm:$0xff]
    %v409 = vld [vmem:[#allocation5 + $0x3c8] sm:$0xff]
    %v410 = vld [vmem:[#allocation5 + $0x3d0] sm:$0xff]
    %v411 = vld [vmem:[#allocation5 + $0x3d8] sm:$0xff]
    %v412 = vld [vmem:[#allocation5 + $0x3e0] sm:$0xff]
    %v413 = vld [vmem:[#allocation5 + $0x3e8] sm:$0xff]
    %v414 = vld [vmem:[#allocation5 + $0x3f0] sm:$0xff]
    %v415 = vld [vmem:[#allocation5 + $0x3f8] sm:$0xff]
    %v416 = vld [vmem:[%s4] sm:$0x3]
    %v418 = vlaneseq
    %v419 = vshrl.u32 %v418, 7
    %v420 = vsub.s32 0, %v419
    %v421 = vrot.slane %v416, %v420
    %v422 = vlaneseq
    %v423 = vshrl.u32 %v422, 7
    %v424 = vsub.s32 1, %v423
    %v425 = vrot.slane %v416, %v424
    %428 = vmatprep.subr.mxu0 %v319
    %429 = vmatpush1.msra.mxu0 %v318
    %430 = vmatprep.subr.mxu0 %v317
    %431 = vmatpush1.msra.mxu0 %v316
    %432 = vmatprep.subr.mxu0 %v315
    %433 = vmatpush1.msra.mxu0 %v314
    %434 = vmatprep.subr.mxu0 %v313
    %435 = vmatpush1.msra.mxu0 %v312
    %436 = vmatprep.subr.mxu0 %v311
    %437 = vmatpush1.msra.mxu0 %v310
    %438 = vmatprep.subr.mxu0 %v309
    %439 = vmatpush1.msra.mxu0 %v308
    %440 = vmatprep.subr.mxu0 %v307
    %441 = vmatpush1.msra.mxu0 %v306
    %442 = vmatprep.subr.mxu0 %v305
    %443 = vmatpush1.msra.mxu0 %v304
    %444 = vmatprep.subr.mxu0 %v303
    %445 = vmatpush1.msra.mxu0 %v302
    %446 = vmatprep.subr.mxu0 %v301
    %447 = vmatpush1.msra.mxu0 %v300
    %448 = vmatprep.subr.mxu0 %v299
    %449 = vmatpush1.msra.mxu0 %v298
    %450 = vmatprep.subr.mxu0 %v297
    %451 = vmatpush1.msra.mxu0 %v296
    %452 = vmatprep.subr.mxu0 %v295
    %453 = vmatpush1.msra.mxu0 %v294
    %454 = vmatprep.subr.mxu0 %v293
    %455 = vmatpush1.msra.mxu0 %v292
    %456 = vmatprep.subr.mxu0 %v291
    %457 = vmatpush1.msra.mxu0 %v290
    %458 = vmatprep.subr.mxu0 %v289
    %459 = vmatpush1.msra.mxu0 %v288
    %460 = vmatprep.subr.mxu0 %v351
    %461 = vmatpush2.msra.mxu0 %v350
    %462 = vmatprep.subr.mxu0 %v349
    %463 = vmatpush2.msra.mxu0 %v348
    %464 = vmatprep.subr.mxu0 %v347
    %465 = vmatpush2.msra.mxu0 %v346
    %466 = vmatprep.subr.mxu0 %v345
    %467 = vmatpush2.msra.mxu0 %v344
    %468 = vmatprep.subr.mxu0 %v343
    %469 = vmatpush2.msra.mxu0 %v342
    %470 = vmatprep.subr.mxu0 %v341
    %471 = vmatpush2.msra.mxu0 %v340
    %472 = vmatprep.subr.mxu0 %v339
    %473 = vmatpush2.msra.mxu0 %v338
    %474 = vmatprep.subr.mxu0 %v337
    %475 = vmatpush2.msra.mxu0 %v336
    %476 = vmatprep.subr.mxu0 %v335
    %477 = vmatpush2.msra.mxu0 %v334
    %478 = vmatprep.subr.mxu0 %v333
    %479 = vmatpush2.msra.mxu0 %v332
    %480 = vmatprep.subr.mxu0 %v331
    %481 = vmatpush2.msra.mxu0 %v330
    %482 = vmatprep.subr.mxu0 %v329
    %483 = vmatpush2.msra.mxu0 %v328
    %484 = vmatprep.subr.mxu0 %v327
    %485 = vmatpush2.msra.mxu0 %v326
    %486 = vmatprep.subr.mxu0 %v325
    %487 = vmatpush2.msra.mxu0 %v324
    %488 = vmatprep.subr.mxu0 %v323
    %489 = vmatpush2.msra.mxu0 %v322
    %490 = vmatprep.subr.mxu0 %v321
    %491 = vmatpush2.msra.mxu0 %v320
    %492 = vmatprep.mubr.f32.mxu0 %v285
    %493 = vmatmul.mubr.f32.gmra.mxu0 %v284
    %v494 = vpop.f32.mrf.mxu0
    %v495 = vadd.f32 %v421, %v494
    %v496 = vpop.f32.mrf.mxu0
    %v497 = vadd.f32 %v425, %v496
    %498 = vdwg.mxu0
    %499 = vmatprep.subr.mxu0 %v383
    %500 = vmatpush1.msra.mxu0 %v382
    %501 = vmatprep.subr.mxu0 %v381
    %502 = vmatpush1.msra.mxu0 %v380
    %503 = vmatprep.subr.mxu0 %v379
    %504 = vmatpush1.msra.mxu0 %v378
    %505 = vmatprep.subr.mxu0 %v377
    %506 = vmatpush1.msra.mxu0 %v376
    %507 = vmatprep.subr.mxu0 %v375
    %508 = vmatpush1.msra.mxu0 %v374
    %509 = vmatprep.subr.mxu0 %v373
    %510 = vmatpush1.msra.mxu0 %v372
    %511 = vmatprep.subr.mxu0 %v371
    %512 = vmatpush1.msra.mxu0 %v370
    %513 = vmatprep.subr.mxu0 %v369
    %514 = vmatpush1.msra.mxu0 %v368
    %515 = vmatprep.subr.mxu0 %v367
    %516 = vmatpush1.msra.mxu0 %v366
    %517 = vmatprep.subr.mxu0 %v365
    %518 = vmatpush1.msra.mxu0 %v364
    %519 = vmatprep.subr.mxu0 %v363
    %520 = vmatpush1.msra.mxu0 %v362
    %521 = vmatprep.subr.mxu0 %v361
    %522 = vmatpush1.msra.mxu0 %v360
    %523 = vmatprep.subr.mxu0 %v359
    %524 = vmatpush1.msra.mxu0 %v358
    %525 = vmatprep.subr.mxu0 %v357
    %526 = vmatpush1.msra.mxu0 %v356
    %527 = vmatprep.subr.mxu0 %v355
    %528 = vmatpush1.msra.mxu0 %v354
    %529 = vmatprep.subr.mxu0 %v353
    %530 = vmatpush1.msra.mxu0 %v352
    %531 = vmatprep.subr.mxu0 %v415
    %532 = vmatpush2.msra.mxu0 %v414
    %533 = vmatprep.subr.mxu0 %v413
    %534 = vmatpush2.msra.mxu0 %v412
    %535 = vmatprep.subr.mxu0 %v411
    %536 = vmatpush2.msra.mxu0 %v410
    %537 = vmatprep.subr.mxu0 %v409
    %538 = vmatpush2.msra.mxu0 %v408
    %539 = vmatprep.subr.mxu0 %v407
    %540 = vmatpush2.msra.mxu0 %v406
    %541 = vmatprep.subr.mxu0 %v405
    %542 = vmatpush2.msra.mxu0 %v404
    %543 = vmatprep.subr.mxu0 %v403
    %544 = vmatpush2.msra.mxu0 %v402
    %545 = vmatprep.subr.mxu0 %v401
    %546 = vmatpush2.msra.mxu0 %v400
    %547 = vmatprep.subr.mxu0 %v399
    %548 = vmatpush2.msra.mxu0 %v398
    %549 = vmatprep.subr.mxu0 %v397
    %550 = vmatpush2.msra.mxu0 %v396
    %551 = vmatprep.subr.mxu0 %v395
    %552 = vmatpush2.msra.mxu0 %v394
    %553 = vmatprep.subr.mxu0 %v393
    %554 = vmatpush2.msra.mxu0 %v392
    %555 = vmatprep.subr.mxu0 %v391
    %556 = vmatpush2.msra.mxu0 %v390
    %557 = vmatprep.subr.mxu0 %v389
    %558 = vmatpush2.msra.mxu0 %v388
    %559 = vmatprep.subr.mxu0 %v387
    %560 = vmatpush2.msra.mxu0 %v386
    %561 = vmatprep.subr.mxu0 %v385
    %562 = vmatpush2.msra.mxu0 %v384
    %563 = vmatprep.mubr.f32.mxu0 %v287
    %564 = vmatmul.mubr.f32.gmra.mxu0 %v286
    %v565 = vpop.f32.mrf.mxu0
    %v566 = vadd.f32 %v495, %v565
    %v567 = vpop.f32.mrf.mxu0
    %v568 = vadd.f32 %v497, %v567
    %569 = vdwg.mxu0
    %v570 = vmax.f32 %v566, 0.0
    %v571 = vmax.f32 %v568, 0.0
    %v572 = vld [vmem:[%s5] sm:$0xff]
    %v573 = vld [vmem:[%s5 + $0x8] sm:$0xff]
    %v574 = vld [vmem:[%s5 + $0x10] sm:$0xff]
    %v575 = vld [vmem:[%s5 + $0x18] sm:$0xff]
    %v576 = vld [vmem:[%s5 + $0x20] sm:$0xff]
    %v577 = vld [vmem:[%s5 + $0x28] sm:$0xff]
    %v578 = vld [vmem:[%s5 + $0x30] sm:$0xff]
    %v579 = vld [vmem:[%s5 + $0x38] sm:$0xff]
    %v580 = vld [vmem:[%s5 + $0x40] sm:$0xff]
    %v581 = vld [vmem:[%s5 + $0x48] sm:$0xff]
    %v582 = vld [vmem:[%s5 + $0x50] sm:$0xff]
    %v583 = vld [vmem:[%s5 + $0x58] sm:$0xff]
    %v584 = vld [vmem:[%s5 + $0x60] sm:$0xff]
    %v585 = vld [vmem:[%s5 + $0x68] sm:$0xff]
    %v586 = vld [vmem:[%s5 + $0x70] sm:$0xff]
    %v587 = vld [vmem:[%s5 + $0x78] sm:$0xff]
    %v588 = vld [vmem:[%s5 + $0x80] sm:$0xff]
    %v589 = vld [vmem:[%s5 + $0x88] sm:$0xff]
    %v590 = vld [vmem:[%s5 + $0x90] sm:$0xff]
    %v591 = vld [vmem:[%s5 + $0x98] sm:$0xff]
    %v592 = vld [vmem:[%s5 + $0xa0] sm:$0xff]
    %v593 = vld [vmem:[%s5 + $0xa8] sm:$0xff]
    %v594 = vld [vmem:[%s5 + $0xb0] sm:$0xff]
    %v595 = vld [vmem:[%s5 + $0xb8] sm:$0xff]
    %v596 = vld [vmem:[%s5 + $0xc0] sm:$0xff]
    %v597 = vld [vmem:[%s5 + $0xc8] sm:$0xff]
    %v598 = vld [vmem:[%s5 + $0xd0] sm:$0xff]
    %v599 = vld [vmem:[%s5 + $0xd8] sm:$0xff]
    %v600 = vld [vmem:[%s5 + $0xe0] sm:$0xff]
    %v601 = vld [vmem:[%s5 + $0xe8] sm:$0xff]
    %v602 = vld [vmem:[%s5 + $0xf0] sm:$0xff]
    %v603 = vld [vmem:[%s5 + $0xf8] sm:$0xff]
    %v604 = vld [vmem:[%s6] sm:$0x1]
    %605 = vmatprep.subr.mxu0 0.0
    %606 = vmatpush1.msra.mxu0 %v587
    %607 = vmatprep.subr.mxu0 0.0
    %608 = vmatpush1.msra.mxu0 %v586
    %609 = vmatprep.subr.mxu0 0.0
    %610 = vmatpush1.msra.mxu0 %v585
    %611 = vmatprep.subr.mxu0 0.0
    %612 = vmatpush1.msra.mxu0 %v584
    %613 = vmatprep.subr.mxu0 0.0
    %614 = vmatpush1.msra.mxu0 %v583
    %615 = vmatprep.subr.mxu0 0.0
    %616 = vmatpush1.msra.mxu0 %v582
    %617 = vmatprep.subr.mxu0 0.0
    %618 = vmatpush1.msra.mxu0 %v581
    %619 = vmatprep.subr.mxu0 0.0
    %620 = vmatpush1.msra.mxu0 %v580
    %621 = vmatprep.subr.mxu0 0.0
    %622 = vmatpush1.msra.mxu0 %v579
    %623 = vmatprep.subr.mxu0 0.0
    %624 = vmatpush1.msra.mxu0 %v578
    %625 = vmatprep.subr.mxu0 0.0
    %626 = vmatpush1.msra.mxu0 %v577
    %627 = vmatprep.subr.mxu0 0.0
    %628 = vmatpush1.msra.mxu0 %v576
    %629 = vmatprep.subr.mxu0 0.0
    %630 = vmatpush1.msra.mxu0 %v575
    %631 = vmatprep.subr.mxu0 0.0
    %632 = vmatpush1.msra.mxu0 %v574
    %633 = vmatprep.subr.mxu0 0.0
    %634 = vmatpush1.msra.mxu0 %v573
    %635 = vmatprep.subr.mxu0 0.0
    %636 = vmatpush1.msra.mxu0 %v572
    %637 = vmatprep.subr.mxu0 0.0
    %638 = vmatpush2.msra.mxu0 %v603
    %639 = vmatprep.subr.mxu0 0.0
    %640 = vmatpush2.msra.mxu0 %v602
    %641 = vmatprep.subr.mxu0 0.0
    %642 = vmatpush2.msra.mxu0 %v601
    %643 = vmatprep.subr.mxu0 0.0
    %644 = vmatpush2.msra.mxu0 %v600
    %645 = vmatprep.subr.mxu0 0.0
    %646 = vmatpush2.msra.mxu0 %v599
    %647 = vmatprep.subr.mxu0 0.0
    %648 = vmatpush2.msra.mxu0 %v598
    %649 = vmatprep.subr.mxu0 0.0
    %650 = vmatpush2.msra.mxu0 %v597
    %651 = vmatprep.subr.mxu0 0.0
    %652 = vmatpush2.msra.mxu0 %v596
    %653 = vmatprep.subr.mxu0 0.0
    %654 = vmatpush2.msra.mxu0 %v595
    %655 = vmatprep.subr.mxu0 0.0
    %656 = vmatpush2.msra.mxu0 %v594
    %657 = vmatprep.subr.mxu0 0.0
    %658 = vmatpush2.msra.mxu0 %v593
    %659 = vmatprep.subr.mxu0 0.0
    %660 = vmatpush2.msra.mxu0 %v592
    %661 = vmatprep.subr.mxu0 0.0
    %662 = vmatpush2.msra.mxu0 %v591
    %663 = vmatprep.subr.mxu0 0.0
    %664 = vmatpush2.msra.mxu0 %v590
    %665 = vmatprep.subr.mxu0 0.0
    %666 = vmatpush2.msra.mxu0 %v589
    %667 = vmatprep.subr.mxu0 0.0
    %668 = vmatpush2.msra.mxu0 %v588
    %669 = vmatprep.mubr.f32.mxu0 %v571
    %670 = vmatmul.mubr.f32.gmra.mxu0 %v570
    %v671 = vpop.f32.mrf.mxu0
    %v672 = vadd.f32 %v604, %v671
    %v673 = vpop.f32.mrf.mxu0
    %674 = vdwg.mxu0
    %v675 = vsub.f32 0.0, %v672
    %v676 = vmul.f32 %v675, 1.442695
    %v677 = vpow.pop %v676
    %v678 = vadd.f32 %v677, 1.0
    %v679 = vrcp.pop %v678
    %vm680 = vcmask 122880
    %681 = vst.msk [vmem:[#allocation7] sm:$0x1] %vm680, %v679
    // Predicated region
    $region38: #{tpu_custom_call.1} parent=1 // pred_check
      _
    $region39: #{tpu_custom_call.1} parent=1 // pred_check_branch
      %683 = sbr.rel (0) target = $region41
    $region40: #{tpu_custom_call.1} parent=1 // pred_region
      %s685 = ssub.s32 16, 16
      %686 = vsyncadd [#allocation4], %s685
      %s688 = sshll.u32 [#allocation7], 4
      %s689 = int_to_ptr.vmem [resolvable:$true] %s688
      %691 = dma.vmem_to_hbm [thread:$0]  %s689, 16, %s7, [#allocation4]
    $region41: #{tpu_custom_call.1} parent=1 // pred_fallthru
      _
    // Predicated region
    $region42: #{tpu_custom_call.1} parent=1 // pred_check
      _
    $region43: #{tpu_custom_call.1} parent=1 // pred_check_branch
      %693 = sbr.rel (0) target = $region45
    $region44: #{tpu_custom_call.1} parent=1 // pred_region
      %694 = dma.done [#allocation4], 16
    $region45: #{tpu_custom_call.1} parent=1 // pred_fallthru
      _
    %695 = vsyncpa [#allocation3], 1
    %696 = vsyncpa [#allocation6], 1
    %697 = vsyncpa [#allocation4], 1

</llo_original>
